<compile_context>
chip_gen: v7x
topology: tpu7x:2x2x1
jax: 0.10.0
libtpu: 0.0.40
codegen_flags: <defaults>
</compile_context>

<pallas_src>
import functools

import jax
import jax.numpy as jnp
from jax.experimental import pallas as pl
from jax.experimental.pallas import tpu as pltpu

_LANE = 128


def _round_up(v, m):
    return (v + m - 1) // m * m


def _pick_tile_f(n_rows, f_pad128, itemsize):
    """Largest 128-multiple feature tile keeping double-buffered x+y tiles ~<=8MiB."""
    budget = 8 * 1024 * 1024
    per_lane_bytes = 4 * n_rows * itemsize        # (x tile + y tile) x 2 buffers
    tile = budget // max(per_lane_bytes, 1)
    tile = (tile // _LANE) * _LANE
    return max(_LANE, min(tile, 2048, f_pad128))


def _train_kernel(x_ref, rm_ref, rv_ref, cnt_ref,
                  y_ref, nrm_ref, nrv_ref,
                  *, eps, unnorm, norm_only):
    x = x_ref[...].astype(jnp.float32)            # (N, TF)
    rm = rm_ref[...]                              # (1, TF)
    rv = rv_ref[...]                              # (1, TF)
    cnt = cnt_ref[0]                              # scalar f32 (SMEM)

    n = jnp.float32(x.shape[0])
    # Single pass over the tile for both moments (one fewer vld pass).
    # Note: less numerically stable than centered two-pass variance; fine in f32
    # for typical RL observation scales.
    s1 = jnp.sum(x, axis=0, keepdims=True)
    s2 = jnp.sum(x * x, axis=0, keepdims=True)
    batch_mean = s1 / n
    # torch.var default is unbiased (correction=1)
    batch_var = (s2 - n * batch_mean * batch_mean) / (n - 1.0)

    # Chan / parallel-variance merge (matches the PyTorch module exactly).
    delta = batch_mean - rm
    tot = cnt + n
    new_mean = rm + delta * (n / tot)
    m2 = rv * cnt + batch_var * n + delta * delta * (cnt * n / tot)
    new_var = m2 / tot

    nrm_ref[...] = new_mean
    nrv_ref[...] = new_var

    # rsqrt once on the (1, TF) row; normalize is a broadcast multiply.
    inv_std = jax.lax.rsqrt(new_var + eps)
    if unnorm:
        y = jnp.sqrt(new_var + eps) * jnp.clip(x, -5.0, 5.0) + new_mean
    elif norm_only:
        y = x * inv_std
    else:
        y = jnp.clip((x - new_mean) * inv_std, -5.0, 5.0)
    y_ref[...] = y.astype(y_ref.dtype)


def _eval_kernel(x_ref, rm_ref, rv_ref, y_ref, *, eps, unnorm, norm_only):
    x = x_ref[...].astype(jnp.float32)
    rm = rm_ref[...]
    rv = rv_ref[...]
    inv_std = jax.lax.rsqrt(rv + eps)
    if unnorm:
        y = jnp.sqrt(rv + eps) * jnp.clip(x, -5.0, 5.0) + rm
    elif norm_only:
        y = x * inv_std
    else:
        y = jnp.clip((x - rm) * inv_std, -5.0, 5.0)
    y_ref[...] = y.astype(y_ref.dtype)


def running_mean_std_forward(x, running_mean, running_var, count,
                             *, epsilon=1e-5, training=True,
                             unnorm=False, norm_only=False):
    """x: [N, F].  Returns (y, new_running_mean, new_running_var, new_count)."""
    n, f = x.shape
    x_dtype = x.dtype

    # Lane-dense feature tiling (pad F up to a multiple of the tile).
    tile_f = _pick_tile_f(n, _round_up(f, _LANE), jnp.dtype(x_dtype).itemsize)
    f_pad = _round_up(f, tile_f)
    pad = f_pad - f

    rm = running_mean.reshape(1, f).astype(jnp.float32)
    rv = running_var.reshape(1, f).astype(jnp.float32)
    if pad:
        x = jnp.pad(x, ((0, 0), (0, pad)))
        rm = jnp.pad(rm, ((0, 0), (0, pad)))
        rv = jnp.pad(rv, ((0, 0), (0, pad)), constant_values=1.0)

    grid = (f_pad // tile_f,)
    x_spec = pl.BlockSpec((n, tile_f), lambda j: (0, j))
    row_spec = pl.BlockSpec((1, tile_f), lambda j: (0, j))
    cnt_spec = pl.BlockSpec((1,), lambda j: (0,),
                            memory_space=pltpu.MemorySpace.SMEM)
    cparams = pltpu.CompilerParams(
        dimension_semantics=("parallel",),          # v7x: shard tiles over 2 TCs
        vmem_limit_bytes=32 * 1024 * 1024)          # safe on v5e/v6e/v7x

    cnt_f32 = jnp.asarray(count, dtype=jnp.float32)

    if training:
        kernel = functools.partial(_train_kernel, eps=float(epsilon),
                                   unnorm=unnorm, norm_only=norm_only)
        y, new_rm, new_rv = pl.pallas_call(
            kernel,
            grid=grid,
            out_shape=(
                jax.ShapeDtypeStruct((n, f_pad), x_dtype),
                jax.ShapeDtypeStruct((1, f_pad), jnp.float32),
                jax.ShapeDtypeStruct((1, f_pad), jnp.float32),
            ),
            in_specs=[x_spec, row_spec, row_spec, cnt_spec],
            out_specs=(x_spec, row_spec, row_spec),
            input_output_aliases={1: 1, 2: 2},      # update stats in place
            compiler_params=cparams,
        )(x, rm, rv, jnp.reshape(cnt_f32, (1,)))
        new_cnt = cnt_f32 + jnp.float32(n)          # scalar update in wrapper
    else:
        kernel = functools.partial(_eval_kernel, eps=float(epsilon),
                                   unnorm=unnorm, norm_only=norm_only)
        y = pl.pallas_call(
            kernel,
            grid=grid,
            out_shape=jax.ShapeDtypeStruct((n, f_pad), x_dtype),
            in_specs=[x_spec, row_spec, row_spec],
            out_specs=x_spec,
            compiler_params=cparams,
        )(x, rm, rv)
        new_rm, new_rv = rm, rv
        new_cnt = cnt_f32

    return y[:, :f], new_rm[0, :f], new_rv[0, :f], new_cnt


def _reference(x, rm, rv, cnt, eps=1e-5):
    n = x.shape[0]
    bmean = x.mean(0)
    bvar = x.var(0, ddof=1)
    delta = bmean - rm
    tot = cnt + n
    new_mean = rm + delta * n / tot
    m2 = rv * cnt + bvar * n + delta ** 2 * cnt * n / tot
    new_var = m2 / tot
    y = (x - new_mean) / jnp.sqrt(new_var + eps)
    return jnp.clip(y, -5.0, 5.0), new_mean, new_var, tot


if __name__ == "__main__":
    key = jax.random.PRNGKey(0)
    N, F = 8, 32                        # in_shape = (32,), batch = 8
    x = jax.random.normal(key, (N, F), dtype=jnp.float32) * 2.0 + 0.5

    # Buffer init per nn.Module.__init__: zeros mean, ones var, count = 1.
    running_mean = jnp.zeros((F,), dtype=jnp.float32)
    running_var = jnp.ones((F,), dtype=jnp.float32)
    count = jnp.ones((), dtype=jnp.float32)

    # Training path (updates stats, normalizes, clamps).
    y, new_rm, new_rv, new_cnt = running_mean_std_forward(
        x, running_mean, running_var, count, epsilon=1e-5,
        training=True, unnorm=False, norm_only=False)
    jax.block_until_ready((y, new_rm, new_rv, new_cnt))

    y_ref, rm_ref, rv_ref, cnt_ref = _reference(
        x, running_mean, running_var, jnp.float32(1.0))
    assert jnp.allclose(y, y_ref, atol=1e-5, rtol=1e-5)
    assert jnp.allclose(new_rm, rm_ref, atol=1e-5, rtol=1e-5)
    assert jnp.allclose(new_rv, rv_ref, atol=1e-5, rtol=1e-5)
    assert jnp.allclose(new_cnt, cnt_ref)

    # Eval path (streaming normalize only, stats untouched).
    y_eval, rm_e, rv_e, cnt_e = running_mean_std_forward(
        x, running_mean, running_var, count, epsilon=1e-5, training=False)
    jax.block_until_ready(y_eval)
    y_eval_ref = jnp.clip(x / jnp.sqrt(1.0 + 1e-5), -5.0, 5.0)
    assert jnp.allclose(y_eval, y_eval_ref, atol=1e-5, rtol=1e-5)
    assert jnp.allclose(rm_e, running_mean, atol=1e-6)
    assert jnp.allclose(rv_e, running_var, atol=1e-6)

    print("KERNEL_OK")
</pallas_src>

<mosaic_0001>
module attributes {stable_mosaic.version = 11 : i64} {
  func.func @_train_kernel(%arg0: i32, %arg1: memref<8x128xf32, #tpu.memory_space<vmem>>, %arg2: memref<1x128xf32, #tpu.memory_space<vmem>>, %arg3: memref<1x128xf32, #tpu.memory_space<vmem>>, %arg4: memref<1xf32, #tpu.memory_space<smem>>, %arg5: memref<8x128xf32, #tpu.memory_space<vmem>>, %arg6: memref<1x128xf32, #tpu.memory_space<vmem>>, %arg7: memref<1x128xf32, #tpu.memory_space<vmem>>) attributes {dimension_semantics = [#tpu.dimension_semantics<parallel>], iteration_bounds = array<i64: 1>, scalar_prefetch = 0 : i64, scratch_operands = 0 : i64, tpu.core_type = #tpu.core_type<tc>, window_params = [{transform_indices = @transform_0, window_bounds = array<i64: 8, 128>}, {transform_indices = @transform_1, window_bounds = array<i64: 1, 128>}, {transform_indices = @transform_2, window_bounds = array<i64: 1, 128>}, {transform_indices = @transform_3, window_bounds = array<i64: 1>}, {transform_indices = @transform_4, window_bounds = array<i64: 8, 128>}, {transform_indices = @transform_5, window_bounds = array<i64: 1, 128>}, {transform_indices = @transform_6, window_bounds = array<i64: 1, 128>}]} {
    %c0 = arith.constant 0 : index
    %c0_0 = arith.constant 0 : index
    %0 = vector.load %arg1[%c0, %c0_0] : memref<8x128xf32, #tpu.memory_space<vmem>>, vector<8x128xf32>
    %c0_1 = arith.constant 0 : index
    %c0_2 = arith.constant 0 : index
    %1 = vector.load %arg2[%c0_1, %c0_2] : memref<1x128xf32, #tpu.memory_space<vmem>>, vector<1x128xf32>
    %c0_3 = arith.constant 0 : index
    %c0_4 = arith.constant 0 : index
    %2 = vector.load %arg3[%c0_3, %c0_4] : memref<1x128xf32, #tpu.memory_space<vmem>>, vector<1x128xf32>
    %c0_5 = arith.constant 0 : index
    %3 = memref.load %arg4[%c0_5] : memref<1xf32, #tpu.memory_space<smem>>
    %cst = arith.constant dense<0.000000e+00> : vector<128xf32>
    %4 = vector.multi_reduction <add>, %0, %cst [0] : vector<8x128xf32> to vector<128xf32>
    %5 = vector.shape_cast %4 : vector<128xf32> to vector<1x128xf32>
    %6 = arith.mulf %0, %0 : vector<8x128xf32>
    %cst_6 = arith.constant dense<0.000000e+00> : vector<128xf32>
    %7 = vector.multi_reduction <add>, %6, %cst_6 [0] : vector<8x128xf32> to vector<128xf32>
    %8 = vector.shape_cast %7 : vector<128xf32> to vector<1x128xf32>
    %cst_7 = arith.constant 8.000000e+00 : f32
    %9 = vector.broadcast %cst_7 : f32 to vector<1x128xf32>
    %10 = arith.divf %5, %9 : vector<1x128xf32>
    %cst_8 = arith.constant 8.000000e+00 : f32
    %11 = vector.broadcast %cst_8 : f32 to vector<1x128xf32>
    %12 = arith.mulf %11, %10 : vector<1x128xf32>
    %13 = arith.mulf %12, %10 : vector<1x128xf32>
    %14 = arith.subf %8, %13 : vector<1x128xf32>
    %cst_9 = arith.constant 8.000000e+00 : f32
    %cst_10 = arith.constant 1.000000e+00 : f32
    %15 = arith.subf %cst_9, %cst_10 : f32
    %16 = vector.broadcast %15 : f32 to vector<1x128xf32>
    %17 = arith.divf %14, %16 : vector<1x128xf32>
    %18 = arith.subf %10, %1 : vector<1x128xf32>
    %cst_11 = arith.constant 8.000000e+00 : f32
    %19 = arith.addf %3, %cst_11 : f32
    %cst_12 = arith.constant 8.000000e+00 : f32
    %20 = arith.divf %cst_12, %19 : f32
    %21 = vector.broadcast %20 : f32 to vector<1x128xf32>
    %22 = arith.mulf %18, %21 : vector<1x128xf32>
    %23 = arith.addf %1, %22 : vector<1x128xf32>
    %24 = vector.broadcast %3 : f32 to vector<1x128xf32>
    %25 = arith.mulf %2, %24 : vector<1x128xf32>
    %cst_13 = arith.constant 8.000000e+00 : f32
    %26 = vector.broadcast %cst_13 : f32 to vector<1x128xf32>
    %27 = arith.mulf %17, %26 : vector<1x128xf32>
    %28 = arith.addf %25, %27 : vector<1x128xf32>
    %29 = arith.mulf %18, %18 : vector<1x128xf32>
    %cst_14 = arith.constant 8.000000e+00 : f32
    %30 = arith.mulf %3, %cst_14 : f32
    %31 = arith.divf %30, %19 : f32
    %32 = vector.broadcast %31 : f32 to vector<1x128xf32>
    %33 = arith.mulf %29, %32 : vector<1x128xf32>
    %34 = arith.addf %28, %33 : vector<1x128xf32>
    %35 = vector.broadcast %19 : f32 to vector<1x128xf32>
    %36 = arith.divf %34, %35 : vector<1x128xf32>
    %c0_15 = arith.constant 0 : index
    %c0_16 = arith.constant 0 : index
    %37 = vector.load %arg6[%c0_15, %c0_16] : memref<1x128xf32, #tpu.memory_space<vmem>>, vector<1x128xf32>
    tpu.vector_store %arg6[%c0_15, %c0_16], %23 {strides = array<i32>} : memref<1x128xf32, #tpu.memory_space<vmem>>, vector<1x128xf32>,
    %c0_17 = arith.constant 0 : index
    %c0_18 = arith.constant 0 : index
    %38 = vector.load %arg7[%c0_17, %c0_18] : memref<1x128xf32, #tpu.memory_space<vmem>>, vector<1x128xf32>
    tpu.vector_store %arg7[%c0_17, %c0_18], %36 {strides = array<i32>} : memref<1x128xf32, #tpu.memory_space<vmem>>, vector<1x128xf32>,
    %cst_19 = arith.constant 9.99999974E-6 : f32
    %39 = vector.broadcast %cst_19 : f32 to vector<1x128xf32>
    %40 = arith.addf %36, %39 : vector<1x128xf32>
    %41 = math.rsqrt %40 : vector<1x128xf32>
    %42 = vector.broadcast %23 : vector<1x128xf32> to vector<8x128xf32>
    %43 = arith.subf %0, %42 : vector<8x128xf32>
    %44 = vector.broadcast %41 : vector<1x128xf32> to vector<8x128xf32>
    %45 = arith.mulf %43, %44 : vector<8x128xf32>
    %cst_20 = arith.constant -5.000000e+00 : f32
    %cst_21 = arith.constant 5.000000e+00 : f32
    %46 = vector.broadcast %cst_20 : f32 to vector<8x128xf32>
    %47 = arith.maximumf %46, %45 : vector<8x128xf32>
    %48 = vector.broadcast %cst_21 : f32 to vector<8x128xf32>
    %49 = arith.minimumf %48, %47 : vector<8x128xf32>
    %c0_22 = arith.constant 0 : index
    %c0_23 = arith.constant 0 : index
    %50 = vector.load %arg5[%c0_22, %c0_23] : memref<8x128xf32, #tpu.memory_space<vmem>>, vector<8x128xf32>
    tpu.vector_store %arg5[%c0_22, %c0_23], %49 {strides = array<i32>} : memref<8x128xf32, #tpu.memory_space<vmem>>, vector<8x128xf32>,
    return
  }
  func.func @transform_0(%arg0: i32) -> (i32, i32) {
    %c0_i32 = arith.constant 0 : i32
    %c0_i32_0 = arith.constant 0 : i32
    return %c0_i32, %arg0 : i32, i32
  }
  func.func @transform_1(%arg0: i32) -> (i32, i32) {
    %c0_i32 = arith.constant 0 : i32
    %c0_i32_0 = arith.constant 0 : i32
    return %c0_i32, %arg0 : i32, i32
  }
  func.func @transform_2(%arg0: i32) -> (i32, i32) {
    %c0_i32 = arith.constant 0 : i32
    %c0_i32_0 = arith.constant 0 : i32
    return %c0_i32, %arg0 : i32, i32
  }
  func.func @transform_3(%arg0: i32) -> i32 {
    %c0_i32 = arith.constant 0 : i32
    %c0_i32_0 = arith.constant 0 : i32
    return %c0_i32 : i32
  }
  func.func @transform_4(%arg0: i32) -> (i32, i32) {
    %c0_i32 = arith.constant 0 : i32
    %c0_i32_0 = arith.constant 0 : i32
    return %c0_i32, %arg0 : i32, i32
  }
  func.func @transform_5(%arg0: i32) -> (i32, i32) {
    %c0_i32 = arith.constant 0 : i32
    %c0_i32_0 = arith.constant 0 : i32
    return %c0_i32, %arg0 : i32, i32
  }
  func.func @transform_6(%arg0: i32) -> (i32, i32) {
    %c0_i32 = arith.constant 0 : i32
    %c0_i32_0 = arith.constant 0 : i32
    return %c0_i32, %arg0 : i32, i32
  }
}

</mosaic_0001>

<llo_original>
// kernel: tpu_custom_call.1
$region0: #{tpu_custom_call.1}
  #allocation0 [shape = 'u32[]', space=smem, size = 0x4, offset = 0x4, fixed_abs, tag = 'smem constant byte address 0x4 - core index']
  #allocation1 [shape = 'u32[144,128]{1,0:T(1,128)}', space=vmem, size = 0x12000, scoped, tag = 'internal scratch']
  #allocation2 [shape = 'f32[1]{0:T(128)S(6)}', space=smem, size = 0x200, scoped, tag = 'scoped memory for tpu_custom_call.1']
  %s0 = inlined_call_operand.vmem [shape: f32[8,128], index: 0, kind: input, shape index: {}]
  %s1 = inlined_call_operand.hbm [shape: f32[1,128], index: 1, kind: input, shape index: {}, may-alias: {1,5}]
  %s2 = inlined_call_operand.hbm [shape: f32[1,128], index: 2, kind: input, shape index: {}, may-alias: {2,6}]
  %s3 = inlined_call_operand.<no memory space> [shape: f32[1], index: 3, kind: input, shape index: {}]
  %s4 = inlined_call_operand.hbm [shape: f32[8,128], index: 4, kind: output, shape index: {0}]
  %s5 = inlined_call_operand.hbm [shape: f32[1,128], index: 5, kind: output, shape index: {1}, may-alias: {1,5}]
  %s6 = inlined_call_operand.hbm [shape: f32[1,128], index: 6, kind: output, shape index: {2}, may-alias: {2,6}]
  %7 = xla_tuple %s4, %s5, %s6
  %s8 = sld [smem:[#allocation0]]
  $region50: #{tpu_custom_call.1} parent=0
    _
  %s10 = ssub.s32 1, %s8
  %s11 = scalar_select 0, %s10, %s8
  %12 = sst [smem:[#allocation2]] %s3
  $region1: #{tpu_custom_call.1} parent=0
    #allocation3 [shape = 'u8[512]{0}', space=vmem, size = 0x400, scoped, tag = 'input window, operand 1, single buffered']
    #allocation4 [shape = 's32[1]{0}', space=sflag, size = 0x4, scoped, tag = 'scoped memory for tpu_custom_call.1']
    #allocation5 [shape = 's32[1]{0}', space=sflag, size = 0x4, scoped, tag = 'scoped memory for tpu_custom_call.1']
    #allocation6 [shape = 'u8[512]{0}', space=vmem, size = 0x400, scoped, tag = 'input window, operand 2, single buffered']
    #allocation7 [shape = 's32[1]{0}', space=sflag, size = 0x4, scoped, tag = 'scoped memory for tpu_custom_call.1']
    #allocation8 [shape = 'u8[4096]{0}', space=vmem, size = 0x1000, scoped, tag = 'output window, operand 0, single buffered']
    #allocation9 [shape = 'u8[512]{0}', space=vmem, size = 0x400, scoped, tag = 'output window, operand 1, single buffered']
    #allocation10 [shape = 's32[1]{0}', space=sflag, size = 0x4, scoped, tag = 'scoped memory for tpu_custom_call.1']
    #allocation11 [shape = 'u8[512]{0}', space=vmem, size = 0x400, scoped, tag = 'output window, operand 2, single buffered']
    %13 = vsyncpa [#allocation4], 0
    %14 = vsyncpa [#allocation7], 0
    %15 = vsyncpa [#allocation5], 0
    %16 = vsyncpa [#allocation10], 0
    // Predicated region
    $region2: #{tpu_custom_call.1} parent=1 // pred_check
      _
    $region3: #{tpu_custom_call.1} parent=1 // pred_check_branch
      %18 = sbr.rel (0) target = $region5
    $region4: #{tpu_custom_call.1} parent=1 // pred_region
      _
    $region5: #{tpu_custom_call.1} parent=1 // pred_fallthru
      _
    // Predicated region
    $region6: #{tpu_custom_call.1} parent=1 // pred_check
      _
    $region7: #{tpu_custom_call.1} parent=1 // pred_check_branch
      %20 = sbr.rel (0) target = $region9
    $region8: #{tpu_custom_call.1} parent=1 // pred_region
      %s22 = ssub.s32 16, 16
      %23 = vsyncadd [#allocation4], %s22
      %s25 = sshll.u32 [#allocation3], 4
      %s26 = int_to_ptr.vmem [resolvable:$true] %s25
      %28 = dma.hbm_to_vmem [thread:$0]  %s1, 16, %s26, [#allocation4]
    $region9: #{tpu_custom_call.1} parent=1 // pred_fallthru
      _
    // Predicated region
    $region10: #{tpu_custom_call.1} parent=1 // pred_check
      _
    $region11: #{tpu_custom_call.1} parent=1 // pred_check_branch
      %30 = sbr.rel (0) target = $region13
    $region12: #{tpu_custom_call.1} parent=1 // pred_region
      %s32 = ssub.s32 16, 16
      %33 = vsyncadd [#allocation7], %s32
      %s35 = sshll.u32 [#allocation6], 4
      %s36 = int_to_ptr.vmem [resolvable:$true] %s35
      %38 = dma.hbm_to_vmem [thread:$0]  %s2, 16, %s36, [#allocation7]
    $region13: #{tpu_custom_call.1} parent=1 // pred_fallthru
      _
    // Predicated region
    $region14: #{tpu_custom_call.1} parent=1 // pred_check
      _
    $region15: #{tpu_custom_call.1} parent=1 // pred_check_branch
      %40 = sbr.rel (0) target = $region17
    $region16: #{tpu_custom_call.1} parent=1 // pred_region
      _
    $region17: #{tpu_custom_call.1} parent=1 // pred_fallthru
      _
    // Predicated region
    $region18: #{tpu_custom_call.1} parent=1 // pred_check
      _
    $region19: #{tpu_custom_call.1} parent=1 // pred_check_branch
      %42 = sbr.rel (0) target = $region21
    $region20: #{tpu_custom_call.1} parent=1 // pred_region
      %43 = dma.done [#allocation4], 16
    $region21: #{tpu_custom_call.1} parent=1 // pred_fallthru
      _
    // Predicated region
    $region22: #{tpu_custom_call.1} parent=1 // pred_check
      _
    $region23: #{tpu_custom_call.1} parent=1 // pred_check_branch
      %45 = sbr.rel (0) target = $region25
    $region24: #{tpu_custom_call.1} parent=1 // pred_region
      %46 = dma.done [#allocation7], 16
    $region25: #{tpu_custom_call.1} parent=1 // pred_fallthru
      _
    %v47 = vld [vmem:[%s0] sm:$0xff]
    %v48 = vld [vmem:[#allocation3] sm:$0x1]
    %v49 = vld [vmem:[#allocation6] sm:$0x1]
    %s50 = sld [smem:[#allocation2]]
    %v51 = vrot.slane %v47, 4
    %v52 = vadd.f32 %v47, %v51
    %v53 = vrot.slane %v52, 2
    %v54 = vadd.f32 %v52, %v53
    %v55 = vrot.slane %v54, 1
    %v56 = vadd.f32 %v54, %v55
    %v57 = vmul.f32 %v47, %v47
    %v58 = vrot.slane %v57, 4
    %v59 = vadd.f32 %v57, %v58
    %v60 = vrot.slane %v59, 2
    %v61 = vadd.f32 %v59, %v60
    %v62 = vrot.slane %v61, 1
    %v63 = vadd.f32 %v61, %v62
    %v64 = vrcp.pop 8.0
    %v65 = vmul.f32 %v56, %v64
    %v66 = vmul.f32 %v65, 8.0
    %v67 = vmul.f32 %v66, %v65
    %v68 = vsub.f32 %v63, %v67
    %v69 = vrcp.pop 7.0
    %v70 = vmul.f32 %v68, %v69
    %v71 = vsub.f32 %v65, %v48
    %s72 = sadd.f32 %s50, 8.0
    %v73 = vstv %s72
    %v74 = vrcp.pop %v73
    %s75 = vtos %v74
    %s76 = smul.f32 8.0, %s75
    %v77 = vstv %s76
    %v78 = vmul.f32 %v71, %v77
    %v79 = vadd.f32 %v48, %v78
    %v80 = vstv %s50
    %v81 = vmul.f32 %v49, %v80
    %v82 = vmul.f32 %v70, 8.0
    %v83 = vadd.f32 %v81, %v82
    %v84 = vmul.f32 %v71, %v71
    %s85 = smul.f32 %s50, 8.0
    %v86 = vstv %s72
    %v87 = vrcp.pop %v86
    %s88 = vtos %v87
    %s89 = smul.f32 %s85, %s88
    %v90 = vstv %s89
    %v91 = vmul.f32 %v84, %v90
    %v92 = vadd.f32 %v83, %v91
    %v93 = vstv %s72
    %v94 = vrcp.pop %v93
    %v95 = vmul.f32 %v92, %v94
    %96 = vst [vmem:[#allocation9] sm:$0x1] %v79
    %97 = vst [vmem:[#allocation11] sm:$0x1] %v95
    %v98 = vadd.f32 %v95, 1e-05
    %v99 = vrsqrt.pop %v98
    %v101 = vlaneseq
    %v102 = vshrl.u32 %v101, 7
    %v103 = vsub.s32 0, %v102
    %v104 = vrot.slane %v79, %v103
    %v106 = vsub.f32 %v47, %v104
    %v108 = vlaneseq
    %v109 = vshrl.u32 %v108, 7
    %v110 = vsub.s32 0, %v109
    %v111 = vrot.slane %v99, %v110
    %v113 = vmul.f32 %v106, %v111
    %v114 = vmax.f32 %v113, -5.0
    %v115 = vmin.f32 %v114, 5.0
    %116 = vst [vmem:[#allocation8] sm:$0xff] %v115
    // Predicated region
    $region26: #{tpu_custom_call.1} parent=1 // pred_check
      _
    $region27: #{tpu_custom_call.1} parent=1 // pred_check_branch
      %118 = sbr.rel (0) target = $region29
    $region28: #{tpu_custom_call.1} parent=1 // pred_region
      %s120 = ssub.s32 128, 128
      %121 = vsyncadd [#allocation5], %s120
      %s123 = sshll.u32 [#allocation8], 4
      %s124 = int_to_ptr.vmem [resolvable:$true] %s123
      %126 = dma.vmem_to_hbm [thread:$0]  %s124, 128, %s4, [#allocation5]
    $region29: #{tpu_custom_call.1} parent=1 // pred_fallthru
      _
    // Predicated region
    $region30: #{tpu_custom_call.1} parent=1 // pred_check
      _
    $region31: #{tpu_custom_call.1} parent=1 // pred_check_branch
      %128 = sbr.rel (0) target = $region33
    $region32: #{tpu_custom_call.1} parent=1 // pred_region
      %s130 = ssub.s32 16, 16
      %131 = vsyncadd [#allocation10], %s130
      %s133 = sshll.u32 [#allocation9], 4
      %s134 = int_to_ptr.vmem [resolvable:$true] %s133
      %136 = dma.vmem_to_hbm [thread:$0]  %s134, 16, %s5, [#allocation10]
    $region33: #{tpu_custom_call.1} parent=1 // pred_fallthru
      _
    // Predicated region
    $region34: #{tpu_custom_call.1} parent=1 // pred_check
      _
    $region35: #{tpu_custom_call.1} parent=1 // pred_check_branch
      %138 = sbr.rel (0) target = $region37
    $region36: #{tpu_custom_call.1} parent=1 // pred_region
      %s140 = ssub.s32 16, 16
      %141 = vsyncadd [#allocation10], %s140
      %s143 = sshll.u32 [#allocation11], 4
      %s144 = int_to_ptr.vmem [resolvable:$true] %s143
      %146 = dma.vmem_to_hbm [thread:$0]  %s144, 16, %s6, [#allocation10]
    $region37: #{tpu_custom_call.1} parent=1 // pred_fallthru
      _
    // Predicated region
    $region38: #{tpu_custom_call.1} parent=1 // pred_check
      _
    $region39: #{tpu_custom_call.1} parent=1 // pred_check_branch
      %148 = sbr.rel (0) target = $region41
    $region40: #{tpu_custom_call.1} parent=1 // pred_region
      %149 = dma.done [#allocation5], 128
    $region41: #{tpu_custom_call.1} parent=1 // pred_fallthru
      _
    // Predicated region
    $region42: #{tpu_custom_call.1} parent=1 // pred_check
      _
    $region43: #{tpu_custom_call.1} parent=1 // pred_check_branch
      %151 = sbr.rel (0) target = $region45
    $region44: #{tpu_custom_call.1} parent=1 // pred_region
      %152 = dma.done [#allocation10], 16
    $region45: #{tpu_custom_call.1} parent=1 // pred_fallthru
      _
    // Predicated region
    $region46: #{tpu_custom_call.1} parent=1 // pred_check
      _
    $region47: #{tpu_custom_call.1} parent=1 // pred_check_branch
      %154 = sbr.rel (0) target = $region49
    $region48: #{tpu_custom_call.1} parent=1 // pred_region
      %155 = dma.done [#allocation10], 16
    $region49: #{tpu_custom_call.1} parent=1 // pred_fallthru
      _
    %156 = vsyncpa [#allocation4], 1
    %157 = vsyncpa [#allocation7], 1
    %158 = vsyncpa [#allocation5], 1
    %159 = vsyncpa [#allocation10], 1

</llo_original>
